<compile_context>
chip_gen: v6e
topology: v6e:2x2x1
jax: 0.10.0
libtpu: 0.0.40
codegen_flags: <defaults>
</compile_context>

<pallas_src>
import functools

import jax
import jax.numpy as jnp
from jax.experimental import pallas as pl
from jax.experimental.pallas import tpu as pltpu


def _round_up(n, m):
    return ((n + m - 1) // m) * m


def _vmem_config():
    """(input double-buffer budget, vmem_limit_bytes), generation-aware."""
    cap = 64 << 20                      # conservative default (v7x-sized)
    try:
        info = pltpu.get_tpu_info()
        cap = int(getattr(info, "vmem_capacity_bytes", cap))
    except Exception:
        pass
    if cap >= (96 << 20):               # v5e / v6e: 128 MiB physical VMEM
        return 48 << 20, 96 << 20
    return 32 << 20, 48 << 20           # v7x: 64 MiB physical VMEM


def _classifier_kernel(x_ref, w1_ref, b1_ref, w2_ref, b2_ref, w3_ref, b3_ref,
                       out_ref, acc_ref, *, seq_len, tile_s, sub, inv_seq,
                       needs_mask):
    s = pl.program_id(1)
    last = pl.num_programs(1) - 1

    # ---- init running partial sums at the first time tile ----
    @pl.when(s == 0)
    def _():
        acc_ref[...] = jnp.zeros_like(acc_ref)

    def _accumulate(x):
        # Keep `sub` sublane partial sums -> whole-vreg vadds only (no XLU
        # cross-sublane reduce in the hot loop).
        tb, ts, hid = x.shape
        acc_ref[...] += x.reshape(tb, ts // sub, sub, hid).sum(axis=1)

    if needs_mask:
        # Only the final (partial) time tile pays for the mask.
        @pl.when(s < last)
        def _():
            _accumulate(x_ref[...].astype(jnp.float32))

        @pl.when(s == last)
        def _():
            x = x_ref[...].astype(jnp.float32)
            t = s * tile_s + jax.lax.broadcasted_iota(
                jnp.int32, (1, x.shape[1], 1), 1)
            _accumulate(jnp.where(t < seq_len, x, 0.0))
    else:
        _accumulate(x_ref[...].astype(jnp.float32))

    # ---- finalize: cross-sublane reduce + mean scale + MLP + sigmoid ----
    @pl.when(s == last)
    def _():
        feats = jnp.sum(acc_ref[...], axis=1) * inv_seq         # (tb, H) mean
        h = jnp.dot(feats, w1_ref[...], preferred_element_type=jnp.float32)
        h = jnp.maximum(h + b1_ref[...], 0.0)
        h = jnp.dot(h, w2_ref[...], preferred_element_type=jnp.float32)
        h = jnp.maximum(h + b2_ref[...], 0.0)
        h = jnp.dot(h, w3_ref[...], preferred_element_type=jnp.float32)
        out_ref[...] = jax.nn.sigmoid(h + b3_ref[...]).astype(out_ref.dtype)


def wav2vec2_classifier_head(hidden_states, w1, b1, w2, b2, w3, b3,
                             *, tile_b=8, tile_s=None,
                             x_vmem_budget_bytes=None,
                             vmem_limit_bytes=None):
    """Fused mean-pool + MLP head.

    hidden_states: (B, S, H) float32 or bfloat16 (wav2vec2 last_hidden_state;
                   feed bf16 directly from the backbone if available).
    Weights are (in, out); biases are (out,) or (1, out).
    """
    B, S, H = hidden_states.shape
    h1 = w1.shape[1]
    h2 = w2.shape[1]
    num_classes = w3.shape[1]

    default_budget, default_limit = _vmem_config()
    x_budget = default_budget if x_vmem_budget_bytes is None else x_vmem_budget_bytes
    vmem_limit = default_limit if vmem_limit_bytes is None else vmem_limit_bytes

    # ---- zero-pad MLP dims to 128-lane multiples (numerically exact) ----
    h1p = _round_up(h1, 128)
    h2p = _round_up(h2, 128)
    cp = _round_up(num_classes, 128)
    f32 = jnp.float32
    w1p = jnp.zeros((H, h1p), f32).at[:, :h1].set(w1.astype(f32))
    b1p = jnp.zeros((1, h1p), f32).at[:, :h1].set(
        jnp.reshape(b1, (1, -1)).astype(f32))
    w2p = jnp.zeros((h1p, h2p), f32).at[:h1, :h2].set(w2.astype(f32))
    b2p = jnp.zeros((1, h2p), f32).at[:, :h2].set(
        jnp.reshape(b2, (1, -1)).astype(f32))
    w3p = jnp.zeros((h2p, cp), f32).at[:h2, :num_classes].set(w3.astype(f32))
    b3p = jnp.zeros((1, cp), f32).at[:, :num_classes].set(
        jnp.reshape(b3, (1, -1)).astype(f32))

    # ---- batch tile: keep tb = 8 for B > 8 (>= 2 tiles => v7x megacore).
    # No host-side jnp.pad: the last batch block may read past B (rows are
    # independent, OOB output rows are masked/sliced away).
    if B <= 8:
        tb = B    # TODO(synk): B <= 8 gives a single batch tile (1 TC on v7x)
    else:
        tb = max(8, (min(tile_b, B) // 8) * 8)
    grid_b = pl.cdiv(B, tb)

    # ---- time tile: as large as the double-buffered VMEM budget allows ----
    itemsize = jnp.dtype(hidden_states.dtype).itemsize
    max_ts = max(8, (x_budget // (2 * tb * H * itemsize)) // 8 * 8)
    ts = max_ts if tile_s is None else max(8, min(tile_s, max_ts))
    if S <= ts:
        ts = S                       # whole time axis in one block, no mask
        needs_mask = False
    else:
        ts = max(8, (ts // 8) * 8)   # (8,128)-aligned time tile
        needs_mask = (S % ts) != 0
    grid_s = pl.cdiv(S, ts)
    sub = 8 if (ts % 8 == 0) else 1  # sublane partial sums in the hot loop

    kernel = functools.partial(
        _classifier_kernel, seq_len=S, tile_s=ts, sub=sub,
        inv_seq=float(1.0 / S), needs_mask=needs_mask)

    const = lambda b, s: (0, 0)      # weights stay resident in VMEM
    grid_spec = pltpu.PrefetchScalarGridSpec(
        num_scalar_prefetch=0,
        grid=(grid_b, grid_s),
        in_specs=[
            pl.BlockSpec((tb, ts, H), lambda b, s: (b, s, 0)),  # streamed x
            pl.BlockSpec((H, h1p), const),
            pl.BlockSpec((1, h1p), const),
            pl.BlockSpec((h1p, h2p), const),
            pl.BlockSpec((1, h2p), const),
            pl.BlockSpec((h2p, cp), const),
            pl.BlockSpec((1, cp), const),
        ],
        out_specs=pl.BlockSpec((tb, cp), lambda b, s: (b, 0)),
        scratch_shapes=[pltpu.VMEM((tb, sub, H), jnp.float32)],
    )

    weight_bytes = 4 * (H * h1p + h1p * h2p + h2p * cp + h1p + h2p + cp)
    cost = pl.CostEstimate(
        flops=int(B * S * H + 2 * B * (H * h1p + h1p * h2p + h2p * cp)),
        transcendentals=int(B * cp),
        bytes_accessed=int(B * S * H * itemsize + weight_bytes + B * cp * 4),
    )

    out_padded = pl.pallas_call(
        kernel,
        out_shape=jax.ShapeDtypeStruct((B, cp), jnp.float32),
        grid_spec=grid_spec,
        compiler_params=pltpu.CompilerParams(
            dimension_semantics=("parallel", "arbitrary"),
            vmem_limit_bytes=int(vmem_limit)),
        cost_estimate=cost,
    )(hidden_states, w1p, b1p, w2p, b2p, w3p, b3p)

    return out_padded[:, :num_classes]


def _reference(hidden_states, w1, b1, w2, b2, w3, b3):
    feats = jnp.mean(hidden_states.astype(jnp.float32), axis=1)
    h = jnp.maximum(feats @ w1 + jnp.reshape(b1, (1, -1)), 0.0)
    h = jnp.maximum(h @ w2 + jnp.reshape(b2, (1, -1)), 0.0)
    return jax.nn.sigmoid(h @ w3 + jnp.reshape(b3, (1, -1)))


if __name__ == "__main__":
    key = jax.random.PRNGKey(0)
    kx, k1, k2, k3, kb1, kb2, kb3, kx2, kx3 = jax.random.split(key, 9)

    # Small shapes consistent with the forward pass.
    B, S, H = 2, 8, 32            # batch, seq, wav2vec2 hidden_size
    h1, h2, num_classes = 24, 16, 4

    # Stand-in for wav2vec2(input_values).last_hidden_state
    hidden_states = jax.random.normal(kx, (B, S, H), dtype=jnp.float32)

    # MLP parameters stored as (in, out); biases as (out,) like PyTorch.
    w1 = jax.random.normal(k1, (H, h1), dtype=jnp.float32) * 0.1
    b1 = jax.random.normal(kb1, (h1,), dtype=jnp.float32) * 0.1
    w2 = jax.random.normal(k2, (h1, h2), dtype=jnp.float32) * 0.1
    b2 = jax.random.normal(kb2, (h2,), dtype=jnp.float32) * 0.1
    w3 = jax.random.normal(k3, (h2, num_classes), dtype=jnp.float32) * 0.1
    b3 = jax.random.normal(kb3, (num_classes,), dtype=jnp.float32) * 0.1

    # Test 1: single-block path.
    out = wav2vec2_classifier_head(hidden_states, w1, b1, w2, b2, w3, b3)
    out = jax.block_until_ready(out)
    ref = _reference(hidden_states, w1, b1, w2, b2, w3, b3)
    assert out.shape == (B, num_classes)
    assert jnp.allclose(out, ref, atol=1e-5, rtol=1e-5)

    # Test 2: time-tiled path with a partial (masked) last time tile.
    B2, S2 = 3, 40
    hs2 = jax.random.normal(kx2, (B2, S2, H), dtype=jnp.float32)
    out2 = wav2vec2_classifier_head(hs2, w1, b1, w2, b2, w3, b3, tile_s=16)
    out2 = jax.block_until_ready(out2)
    ref2 = _reference(hs2, w1, b1, w2, b2, w3, b3)
    assert out2.shape == (B2, num_classes)
    assert jnp.allclose(out2, ref2, atol=1e-5, rtol=1e-5)

    # Test 3: ragged batch (B > 8, not a multiple of tb) -> boundary batch
    # block without any host-side padding copy.
    B3, S3 = 10, 40
    hs3 = jax.random.normal(kx3, (B3, S3, H), dtype=jnp.float32)
    out3 = wav2vec2_classifier_head(hs3, w1, b1, w2, b2, w3, b3, tile_s=16)
    out3 = jax.block_until_ready(out3)
    ref3 = _reference(hs3, w1, b1, w2, b2, w3, b3)
    assert out3.shape == (B3, num_classes)
    assert jnp.allclose(out3, ref3, atol=1e-5, rtol=1e-5)

    print("KERNEL_OK")
</pallas_src>

<mosaic_0001>
module attributes {stable_mosaic.version = 11 : i64} {
  func.func @_classifier_kernel(%arg0: i32, %arg1: i32, %arg2: memref<2x8x32xf32, #tpu.memory_space<vmem>>, %arg3: memref<32x128xf32, #tpu.memory_space<vmem>>, %arg4: memref<1x128xf32, #tpu.memory_space<vmem>>, %arg5: memref<128x128xf32, #tpu.memory_space<vmem>>, %arg6: memref<1x128xf32, #tpu.memory_space<vmem>>, %arg7: memref<128x128xf32, #tpu.memory_space<vmem>>, %arg8: memref<1x128xf32, #tpu.memory_space<vmem>>, %arg9: memref<2x128xf32, #tpu.memory_space<vmem>>, %arg10: memref<2x8x32xf32, #tpu.memory_space<vmem>>) attributes {dimension_semantics = [#tpu.dimension_semantics<parallel>, #tpu.dimension_semantics<arbitrary>], iteration_bounds = array<i64: 1, 1>, scalar_prefetch = 0 : i64, scratch_operands = 1 : i64, tpu.core_type = #tpu.core_type<tc>, window_params = [{transform_indices = @transform_0, window_bounds = array<i64: 2, 8, 32>}, {pipeline_mode = #tpu.pipeline_mode<synchronous>, transform_indices = @transform_1, window_bounds = array<i64: 32, 128>}, {pipeline_mode = #tpu.pipeline_mode<synchronous>, transform_indices = @transform_2, window_bounds = array<i64: 1, 128>}, {pipeline_mode = #tpu.pipeline_mode<synchronous>, transform_indices = @transform_3, window_bounds = array<i64: 128, 128>}, {pipeline_mode = #tpu.pipeline_mode<synchronous>, transform_indices = @transform_4, window_bounds = array<i64: 1, 128>}, {pipeline_mode = #tpu.pipeline_mode<synchronous>, transform_indices = @transform_5, window_bounds = array<i64: 128, 128>}, {pipeline_mode = #tpu.pipeline_mode<synchronous>, transform_indices = @transform_6, window_bounds = array<i64: 1, 128>}, {transform_indices = @transform_7, window_bounds = array<i64: 2, 128>}]} {
    %c0_i32 = arith.constant 0 : i32
    %0 = arith.cmpi eq, %arg1, %c0_i32 : i32
    %1 = arith.extui %0 : i1 to i32
    %c0_i32_0 = arith.constant 0 : i32
    %2 = arith.cmpi ne, %1, %c0_i32_0 : i32
    scf.if %2 {
      %cst_11 = arith.constant 0.000000e+00 : f32
      %12 = vector.broadcast %cst_11 : f32 to vector<2x8x32xf32>
      %c0_12 = arith.constant 0 : index
      %c0_13 = arith.constant 0 : index
      %c0_14 = arith.constant 0 : index
      %13 = vector.load %arg10[%c0_12, %c0_13, %c0_14] : memref<2x8x32xf32, #tpu.memory_space<vmem>>, vector<2x8x32xf32>
      tpu.vector_store %arg10[%c0_12, %c0_13, %c0_14], %12 {strides = array<i32>} : memref<2x8x32xf32, #tpu.memory_space<vmem>>, vector<2x8x32xf32>,
    } else {
    }
    %c0 = arith.constant 0 : index
    %c0_1 = arith.constant 0 : index
    %c0_2 = arith.constant 0 : index
    %3 = vector.load %arg2[%c0, %c0_1, %c0_2] : memref<2x8x32xf32, #tpu.memory_space<vmem>>, vector<2x8x32xf32>
    %c0_3 = arith.constant 0 : index
    %c0_4 = arith.constant 0 : index
    %c0_5 = arith.constant 0 : index
    %4 = vector.load %arg10[%c0_3, %c0_4, %c0_5] : memref<2x8x32xf32, #tpu.memory_space<vmem>>, vector<2x8x32xf32>
    %5 = vector.shape_cast %3 : vector<2x8x32xf32> to vector<2x1x8x32xf32>
    %cst = arith.constant dense<0.000000e+00> : vector<2x8x32xf32>
    %6 = vector.multi_reduction <add>, %5, %cst [1] : vector<2x1x8x32xf32> to vector<2x8x32xf32>
    %7 = arith.addf %4, %6 : vector<2x8x32xf32>
    %c0_6 = arith.constant 0 : index
    %c0_7 = arith.constant 0 : index
    %c0_8 = arith.constant 0 : index
    %8 = vector.load %arg10[%c0_6, %c0_7, %c0_8] : memref<2x8x32xf32, #tpu.memory_space<vmem>>, vector<2x8x32xf32>
    tpu.vector_store %arg10[%c0_6, %c0_7, %c0_8], %7 {strides = array<i32>} : memref<2x8x32xf32, #tpu.memory_space<vmem>>, vector<2x8x32xf32>,
    %c0_i32_9 = arith.constant 0 : i32
    %9 = arith.cmpi eq, %arg1, %c0_i32_9 : i32
    %10 = arith.extui %9 : i1 to i32
    %c0_i32_10 = arith.constant 0 : i32
    %11 = arith.cmpi ne, %10, %c0_i32_10 : i32
    scf.if %11 {
      %c0_11 = arith.constant 0 : index
      %c0_12 = arith.constant 0 : index
      %c0_13 = arith.constant 0 : index
      %12 = vector.load %arg10[%c0_11, %c0_12, %c0_13] : memref<2x8x32xf32, #tpu.memory_space<vmem>>, vector<2x8x32xf32>
      %cst_14 = arith.constant dense<0.000000e+00> : vector<2x32xf32>
      %13 = vector.multi_reduction <add>, %12, %cst_14 [1] : vector<2x8x32xf32> to vector<2x32xf32>
      %cst_15 = arith.constant 1.250000e-01 : f32
      %14 = vector.broadcast %cst_15 : f32 to vector<2x32xf32>
      %15 = arith.mulf %13, %14 : vector<2x32xf32>
      %c0_16 = arith.constant 0 : index
      %c0_17 = arith.constant 0 : index
      %16 = vector.load %arg3[%c0_16, %c0_17] : memref<32x128xf32, #tpu.memory_space<vmem>>, vector<32x128xf32>
      %cst_18 = arith.constant dense<0.000000e+00> : vector<2x128xf32>
      %17 = tpu.matmul %15, %16, %cst_18 {dimension_numbers = #tpu.dot_dimension_numbers<[1], [0], [0], [1], [0, 0, 1, 1], [], []>} : vector<2x32xf32>, vector<32x128xf32>, vector<2x128xf32> -> vector<2x128xf32>
      %c0_19 = arith.constant 0 : index
      %c0_20 = arith.constant 0 : index
      %18 = vector.load %arg4[%c0_19, %c0_20] : memref<1x128xf32, #tpu.memory_space<vmem>>, vector<1x128xf32>
      %19 = vector.broadcast %18 : vector<1x128xf32> to vector<2x128xf32>
      %20 = arith.addf %17, %19 : vector<2x128xf32>
      %cst_21 = arith.constant 0.000000e+00 : f32
      %21 = vector.broadcast %cst_21 : f32 to vector<2x128xf32>
      %22 = arith.maximumf %20, %21 : vector<2x128xf32>
      %c0_22 = arith.constant 0 : index
      %c0_23 = arith.constant 0 : index
      %23 = vector.load %arg5[%c0_22, %c0_23] : memref<128x128xf32, #tpu.memory_space<vmem>>, vector<128x128xf32>
      %cst_24 = arith.constant dense<0.000000e+00> : vector<2x128xf32>
      %24 = tpu.matmul %22, %23, %cst_24 {dimension_numbers = #tpu.dot_dimension_numbers<[1], [0], [0], [1], [0, 0, 1, 1], [], []>} : vector<2x128xf32>, vector<128x128xf32>, vector<2x128xf32> -> vector<2x128xf32>
      %c0_25 = arith.constant 0 : index
      %c0_26 = arith.constant 0 : index
      %25 = vector.load %arg6[%c0_25, %c0_26] : memref<1x128xf32, #tpu.memory_space<vmem>>, vector<1x128xf32>
      %26 = vector.broadcast %25 : vector<1x128xf32> to vector<2x128xf32>
      %27 = arith.addf %24, %26 : vector<2x128xf32>
      %cst_27 = arith.constant 0.000000e+00 : f32
      %28 = vector.broadcast %cst_27 : f32 to vector<2x128xf32>
      %29 = arith.maximumf %27, %28 : vector<2x128xf32>
      %c0_28 = arith.constant 0 : index
      %c0_29 = arith.constant 0 : index
      %30 = vector.load %arg7[%c0_28, %c0_29] : memref<128x128xf32, #tpu.memory_space<vmem>>, vector<128x128xf32>
      %cst_30 = arith.constant dense<0.000000e+00> : vector<2x128xf32>
      %31 = tpu.matmul %29, %30, %cst_30 {dimension_numbers = #tpu.dot_dimension_numbers<[1], [0], [0], [1], [0, 0, 1, 1], [], []>} : vector<2x128xf32>, vector<128x128xf32>, vector<2x128xf32> -> vector<2x128xf32>
      %c0_31 = arith.constant 0 : index
      %c0_32 = arith.constant 0 : index
      %32 = vector.load %arg8[%c0_31, %c0_32] : memref<1x128xf32, #tpu.memory_space<vmem>>, vector<1x128xf32>
      %33 = vector.broadcast %32 : vector<1x128xf32> to vector<2x128xf32>
      %34 = arith.addf %31, %33 : vector<2x128xf32>
      %35 = arith.negf %34 : vector<2x128xf32>
      %36 = math.exp %35 : vector<2x128xf32>
      %cst_33 = arith.constant 1.000000e+00 : f32
      %37 = vector.broadcast %cst_33 : f32 to vector<2x128xf32>
      %38 = arith.addf %37, %36 : vector<2x128xf32>
      %39 = arith.divf %37, %38 : vector<2x128xf32>
      %c0_34 = arith.constant 0 : index
      %c0_35 = arith.constant 0 : index
      %40 = vector.load %arg9[%c0_34, %c0_35] : memref<2x128xf32, #tpu.memory_space<vmem>>, vector<2x128xf32>
      tpu.vector_store %arg9[%c0_34, %c0_35], %39 {strides = array<i32>} : memref<2x128xf32, #tpu.memory_space<vmem>>, vector<2x128xf32>,
    } else {
    }
    return
  }
  func.func @transform_0(%arg0: i32, %arg1: i32) -> (i32, i32, i32) {
    %c0_i32 = arith.constant 0 : i32
    %c0_i32_0 = arith.constant 0 : i32
    return %arg0, %arg1, %c0_i32 : i32, i32, i32
  }
  func.func @transform_1(%arg0: i32, %arg1: i32) -> (i32, i32) {
    %c0_i32 = arith.constant 0 : i32
    %c0_i32_0 = arith.constant 0 : i32
    %c0_i32_1 = arith.constant 0 : i32
    return %c0_i32, %c0_i32_0 : i32, i32
  }
  func.func @transform_2(%arg0: i32, %arg1: i32) -> (i32, i32) {
    %c0_i32 = arith.constant 0 : i32
    %c0_i32_0 = arith.constant 0 : i32
    %c0_i32_1 = arith.constant 0 : i32
    return %c0_i32, %c0_i32_0 : i32, i32
  }
  func.func @transform_3(%arg0: i32, %arg1: i32) -> (i32, i32) {
    %c0_i32 = arith.constant 0 : i32
    %c0_i32_0 = arith.constant 0 : i32
    %c0_i32_1 = arith.constant 0 : i32
    return %c0_i32, %c0_i32_0 : i32, i32
  }
  func.func @transform_4(%arg0: i32, %arg1: i32) -> (i32, i32) {
    %c0_i32 = arith.constant 0 : i32
    %c0_i32_0 = arith.constant 0 : i32
    %c0_i32_1 = arith.constant 0 : i32
    return %c0_i32, %c0_i32_0 : i32, i32
  }
  func.func @transform_5(%arg0: i32, %arg1: i32) -> (i32, i32) {
    %c0_i32 = arith.constant 0 : i32
    %c0_i32_0 = arith.constant 0 : i32
    %c0_i32_1 = arith.constant 0 : i32
    return %c0_i32, %c0_i32_0 : i32, i32
  }
  func.func @transform_6(%arg0: i32, %arg1: i32) -> (i32, i32) {
    %c0_i32 = arith.constant 0 : i32
    %c0_i32_0 = arith.constant 0 : i32
    %c0_i32_1 = arith.constant 0 : i32
    return %c0_i32, %c0_i32_0 : i32, i32
  }
  func.func @transform_7(%arg0: i32, %arg1: i32) -> (i32, i32) {
    %c0_i32 = arith.constant 0 : i32
    %c0_i32_0 = arith.constant 0 : i32
    return %arg0, %c0_i32 : i32, i32
  }
}

</mosaic_0001>

<llo_original>
// kernel: tpu_custom_call.1
$region0: #{tpu_custom_call.1}
  #allocation0 [shape = 'u32[]', space=smem, size = 0x4, offset = 0x4, fixed_abs, tag = 'smem constant byte address 0x4 - core index']
  #allocation1 [shape = 'u32[144,128]{1,0:T(1,128)}', space=vmem, size = 0x12000, scoped, tag = 'internal scratch']
  #allocation2 [shape = 'f32[2,8,32]{2,1,0:T(8,128)}', space=vmem, size = 0x2000, scoped, tag = 'scratch operand']
  %s0 = inlined_call_operand.hbm [shape: f32[2,8,32], index: 0, kind: input, shape index: {}]
  %s1 = inlined_call_operand.hbm [shape: f32[32,128], index: 1, kind: input, shape index: {}]
  %s2 = inlined_call_operand.vmem [shape: f32[1,128], index: 2, kind: input, shape index: {}]
  %s3 = inlined_call_operand.hbm [shape: f32[128,128], index: 3, kind: input, shape index: {}]
  %s4 = inlined_call_operand.vmem [shape: f32[1,128], index: 4, kind: input, shape index: {}]
  %s5 = inlined_call_operand.hbm [shape: f32[128,128], index: 5, kind: input, shape index: {}]
  %s6 = inlined_call_operand.vmem [shape: f32[1,128], index: 6, kind: input, shape index: {}]
  %s7 = inlined_call_operand.hbm [shape: f32[2,128], index: 7, kind: output, shape index: {}]
  %s8 = sld [smem:[#allocation0]]
  $region62: #{tpu_custom_call.1} parent=0
    _
  %s10 = ssub.s32 1, %s8
  %s11 = scalar_select 0, %s10, %s8
  $region1: #{tpu_custom_call.1} parent=0
    #allocation3 [shape = 'u8[8192]{0}', space=vmem, size = 0x2000, scoped, tag = 'input window, operand 0, single buffered']
    #allocation4 [shape = 's32[1]{0}', space=sflag, size = 0x4, scoped, tag = 'scoped memory for tpu_custom_call.1']
    #allocation5 [shape = 's32[1]{0}', space=sflag, size = 0x4, scoped, tag = 'scoped memory for tpu_custom_call.1']
    #allocation6 [shape = 'u8[16384]{0}', space=vmem, size = 0x4000, scoped, tag = 'input window, operand 1, single buffered']
    #allocation7 [shape = 's32[1]{0}', space=sflag, size = 0x4, scoped, tag = 'scoped memory for tpu_custom_call.1']
    #allocation8 [shape = 'u8[65536]{0}', space=vmem, size = 0x10000, scoped, tag = 'input window, operand 3, single buffered']
    #allocation9 [shape = 'u8[65536]{0}', space=vmem, size = 0x10000, scoped, tag = 'input window, operand 5, single buffered']
    #allocation10 [shape = 's32[1]{0}', space=sflag, size = 0x4, scoped, tag = 'scoped memory for tpu_custom_call.1']
    #allocation11 [shape = 'u8[1024]{0}', space=vmem, size = 0x400, scoped, tag = 'output window, operand 0, single buffered']
    %12 = vsyncpa [#allocation4], 0
    %13 = vsyncpa [#allocation7], 0
    %14 = vsyncpa [#allocation10], 0
    %15 = vsyncpa [#allocation5], 0
    // Predicated region
    $region2: #{tpu_custom_call.1} parent=1 // pred_check
      _
    $region3: #{tpu_custom_call.1} parent=1 // pred_check_branch
      %17 = sbr.rel (0) target = $region5
    $region4: #{tpu_custom_call.1} parent=1 // pred_region
      %s19 = ssub.s32 256, 256
      %20 = vsyncadd [#allocation4], %s19
      %s21 = sshll.u32 [#allocation3], 4
      %s22 = int_to_ptr.vmem [resolvable:$true] %s21
      %27 = dma.hbm_to_vmem [thread:$0]  %s0, 256, %s22, [#allocation4], 128, 128, 8
    $region5: #{tpu_custom_call.1} parent=1 // pred_fallthru
      _
    // Predicated region
    $region6: #{tpu_custom_call.1} parent=1 // pred_check
      _
    $region7: #{tpu_custom_call.1} parent=1 // pred_check_branch
      %29 = sbr.rel (0) target = $region9
    $region8: #{tpu_custom_call.1} parent=1 // pred_region
      %s31 = ssub.s32 512, 512
      %32 = vsyncadd [#allocation7], %s31
      %s33 = sshll.u32 [#allocation6], 4
      %s34 = int_to_ptr.vmem [resolvable:$true] %s33
      %39 = dma.hbm_to_vmem [thread:$0]  %s1, 512, %s34, [#allocation7], 128, 128, 8
    $region9: #{tpu_custom_call.1} parent=1 // pred_fallthru
      _
    // Predicated region
    $region10: #{tpu_custom_call.1} parent=1 // pred_check
      _
    $region11: #{tpu_custom_call.1} parent=1 // pred_check_branch
      %41 = sbr.rel (0) target = $region13
    $region12: #{tpu_custom_call.1} parent=1 // pred_region
      _
    $region13: #{tpu_custom_call.1} parent=1 // pred_fallthru
      _
    // Predicated region
    $region14: #{tpu_custom_call.1} parent=1 // pred_check
      _
    $region15: #{tpu_custom_call.1} parent=1 // pred_check_branch
      %43 = sbr.rel (0) target = $region17
    $region16: #{tpu_custom_call.1} parent=1 // pred_region
      %s45 = ssub.s32 2048, 2048
      %46 = vsyncadd [#allocation7], %s45
      %s47 = sshll.u32 [#allocation8], 4
      %s48 = int_to_ptr.vmem [resolvable:$true] %s47
      %53 = dma.hbm_to_vmem [thread:$0]  %s3, 2048, %s48, [#allocation7], 128, 128, 8
    $region17: #{tpu_custom_call.1} parent=1 // pred_fallthru
      _
    // Predicated region
    $region18: #{tpu_custom_call.1} parent=1 // pred_check
      _
    $region19: #{tpu_custom_call.1} parent=1 // pred_check_branch
      %55 = sbr.rel (0) target = $region21
    $region20: #{tpu_custom_call.1} parent=1 // pred_region
      _
    $region21: #{tpu_custom_call.1} parent=1 // pred_fallthru
      _
    // Predicated region
    $region22: #{tpu_custom_call.1} parent=1 // pred_check
      _
    $region23: #{tpu_custom_call.1} parent=1 // pred_check_branch
      %57 = sbr.rel (0) target = $region25
    $region24: #{tpu_custom_call.1} parent=1 // pred_region
      %s59 = ssub.s32 2048, 2048
      %60 = vsyncadd [#allocation10], %s59
      %s61 = sshll.u32 [#allocation9], 4
      %s62 = int_to_ptr.vmem [resolvable:$true] %s61
      %67 = dma.hbm_to_vmem [thread:$0]  %s5, 2048, %s62, [#allocation10], 128, 128, 8
    $region25: #{tpu_custom_call.1} parent=1 // pred_fallthru
      _
    // Predicated region
    $region26: #{tpu_custom_call.1} parent=1 // pred_check
      _
    $region27: #{tpu_custom_call.1} parent=1 // pred_check_branch
      %69 = sbr.rel (0) target = $region29
    $region28: #{tpu_custom_call.1} parent=1 // pred_region
      _
    $region29: #{tpu_custom_call.1} parent=1 // pred_fallthru
      _
    // Predicated region
    $region30: #{tpu_custom_call.1} parent=1 // pred_check
      _
    $region31: #{tpu_custom_call.1} parent=1 // pred_check_branch
      %71 = sbr.rel (0) target = $region33
    $region32: #{tpu_custom_call.1} parent=1 // pred_region
      %72 = dma.done [#allocation4], 256
    $region33: #{tpu_custom_call.1} parent=1 // pred_fallthru
      _
    // Predicated region
    $region34: #{tpu_custom_call.1} parent=1 // pred_check
      _
    $region35: #{tpu_custom_call.1} parent=1 // pred_check_branch
      %74 = sbr.rel (0) target = $region37
    $region36: #{tpu_custom_call.1} parent=1 // pred_region
      %75 = dma.done [#allocation7], 512
    $region37: #{tpu_custom_call.1} parent=1 // pred_fallthru
      _
    // Predicated region
    $region38: #{tpu_custom_call.1} parent=1 // pred_check
      _
    $region39: #{tpu_custom_call.1} parent=1 // pred_check_branch
      %77 = sbr.rel (0) target = $region41
    $region40: #{tpu_custom_call.1} parent=1 // pred_region
      %78 = dma.done [#allocation7], 2048
    $region41: #{tpu_custom_call.1} parent=1 // pred_fallthru
      _
    // Predicated region
    $region42: #{tpu_custom_call.1} parent=1 // pred_check
      _
    $region43: #{tpu_custom_call.1} parent=1 // pred_check_branch
      %80 = sbr.rel (0) target = $region45
    $region44: #{tpu_custom_call.1} parent=1 // pred_region
      %81 = dma.done [#allocation10], 2048
    $region45: #{tpu_custom_call.1} parent=1 // pred_fallthru
      _
    %p82 = scmp.eq.s32.totalorder 0, 0
    // Predicated region
    $region46: #{tpu_custom_call.1} parent=1 // pred_check
      %p83 = pneg %p82
    $region47: #{tpu_custom_call.1} parent=1 // pred_check_branch
      %85 = sbr.rel (%p83) target = $region49
    $region48: #{tpu_custom_call.1} parent=1 // pred_region
      %vm86 = vcmask 261120
      %87 = vst.msk [vmem:[#allocation2] sm:$0xff] %vm86, 0.0
      %88 = vst.msk [vmem:[#allocation2 + $0x8] sm:$0xff] %vm86, 0.0
    $region49: #{tpu_custom_call.1} parent=1 // pred_fallthru
      _
    %v89 = vld [vmem:[#allocation3] sm:$0xff]
    %v90 = vld [vmem:[#allocation3 + $0x8] sm:$0xff]
    %v91 = vld [vmem:[#allocation2] sm:$0xff]
    %v92 = vld [vmem:[#allocation2 + $0x8] sm:$0xff]
    %v93 = vadd.f32 %v89, 0.0
    %v94 = vadd.f32 %v90, 0.0
    %v95 = vadd.f32 %v91, %v93
    %v96 = vadd.f32 %v92, %v94
    %vm97 = vcmask 261120
    %98 = vst.msk [vmem:[#allocation2] sm:$0xff] %vm97, %v95
    %99 = vst.msk [vmem:[#allocation2 + $0x8] sm:$0xff] %vm97, %v96
    // Predicated region
    $region50: #{tpu_custom_call.1} parent=1 // pred_check
      %p100 = pneg %p82
    $region51: #{tpu_custom_call.1} parent=1 // pred_check_branch
      %102 = sbr.rel (%p100) target = $region53
    $region52: #{tpu_custom_call.1} parent=1 // pred_region
      %v103 = vld [vmem:[#allocation2] sm:$0xff]
      %v104 = vld [vmem:[#allocation2 + $0x8] sm:$0xff]
      %v105 = vsel %vm97, %v103, 0.0
      %v106 = vrot.slane %v105, 4
      %v107 = vadd.f32 %v105, %v106
      %v108 = vrot.slane %v107, 2
      %v109 = vadd.f32 %v107, %v108
      %v110 = vrot.slane %v109, 1
      %v111 = vadd.f32 %v109, %v110
      %v112 = vsel %vm97, %v104, 0.0
      %v113 = vrot.slane %v112, 4
      %v114 = vadd.f32 %v112, %v113
      %v115 = vrot.slane %v114, 2
      %v116 = vadd.f32 %v114, %v115
      %v117 = vrot.slane %v116, 1
      %v118 = vadd.f32 %v116, %v117
      %v119 = vmul.f32 %v111, 0.125
      %v120 = vmul.f32 %v118, 0.125
      %v121 = vld [vmem:[#allocation6] sm:$0xff]
      %v122 = vld [vmem:[#allocation6 + $0x8] sm:$0xff]
      %v123 = vld [vmem:[#allocation6 + $0x10] sm:$0xff]
      %v124 = vld [vmem:[#allocation6 + $0x18] sm:$0xff]
      %v125 = vld [vmem:[%s2] sm:$0x1]
      %v127 = vlaneseq
      %v128 = vshrl.u32 %v127, 7
      %v129 = vsub.s32 0, %v128
      %v130 = vrot.slane %v125, %v129
      %vm134 = vcmask 1041409
      %v135 = vsel %vm134, %v120, %v119
      %v136 = vsel %vm97, %v135, 0
      %138 = vmatprep.subr.mxu0 0.0
      %139 = vmatpush1.msra.mxu0 0.0
      %140 = vmatprep.subr.mxu0 0.0
      %141 = vmatpush1.msra.mxu0 0.0
      %142 = vmatprep.subr.mxu0 0.0
      %143 = vmatpush1.msra.mxu0 0.0
      %144 = vmatprep.subr.mxu0 0.0
      %145 = vmatpush1.msra.mxu0 0.0
      %146 = vmatprep.subr.mxu0 0.0
      %147 = vmatpush1.msra.mxu0 0.0
      %148 = vmatprep.subr.mxu0 0.0
      %149 = vmatpush1.msra.mxu0 0.0
      %150 = vmatprep.subr.mxu0 0.0
      %151 = vmatpush1.msra.mxu0 0.0
      %152 = vmatprep.subr.mxu0 0.0
      %153 = vmatpush1.msra.mxu0 0.0
      %154 = vmatprep.subr.mxu0 0.0
      %155 = vmatpush1.msra.mxu0 0.0
      %156 = vmatprep.subr.mxu0 0.0
      %157 = vmatpush1.msra.mxu0 0.0
      %158 = vmatprep.subr.mxu0 0.0
      %159 = vmatpush1.msra.mxu0 0.0
      %160 = vmatprep.subr.mxu0 0.0
      %161 = vmatpush1.msra.mxu0 0.0
      %162 = vmatprep.subr.mxu0 0.0
      %163 = vmatpush1.msra.mxu0 %v124
      %164 = vmatprep.subr.mxu0 0.0
      %165 = vmatpush1.msra.mxu0 %v123
      %166 = vmatprep.subr.mxu0 0.0
      %167 = vmatpush1.msra.mxu0 %v122
      %168 = vmatprep.subr.mxu0 0.0
      %169 = vmatpush1.msra.mxu0 %v121
      %170 = vmatprep.subr.mxu0 0.0
      %171 = vmatpush2.msra.mxu0 0.0
      %172 = vmatprep.subr.mxu0 0.0
      %173 = vmatpush2.msra.mxu0 0.0
      %174 = vmatprep.subr.mxu0 0.0
      %175 = vmatpush2.msra.mxu0 0.0
      %176 = vmatprep.subr.mxu0 0.0
      %177 = vmatpush2.msra.mxu0 0.0
      %178 = vmatprep.subr.mxu0 0.0
      %179 = vmatpush2.msra.mxu0 0.0
      %180 = vmatprep.subr.mxu0 0.0
      %181 = vmatpush2.msra.mxu0 0.0
      %182 = vmatprep.subr.mxu0 0.0
      %183 = vmatpush2.msra.mxu0 0.0
      %184 = vmatprep.subr.mxu0 0.0
      %185 = vmatpush2.msra.mxu0 0.0
      %186 = vmatprep.subr.mxu0 0.0
      %187 = vmatpush2.msra.mxu0 0.0
      %188 = vmatprep.subr.mxu0 0.0
      %189 = vmatpush2.msra.mxu0 0.0
      %190 = vmatprep.subr.mxu0 0.0
      %191 = vmatpush2.msra.mxu0 0.0
      %192 = vmatprep.subr.mxu0 0.0
      %193 = vmatpush2.msra.mxu0 0.0
      %194 = vmatprep.subr.mxu0 0.0
      %195 = vmatpush2.msra.mxu0 0.0
      %196 = vmatprep.subr.mxu0 0.0
      %197 = vmatpush2.msra.mxu0 0.0
      %198 = vmatprep.subr.mxu0 0.0
      %199 = vmatpush2.msra.mxu0 0.0
      %200 = vmatprep.subr.mxu0 0.0
      %201 = vmatpush2.msra.mxu0 0.0
      %202 = vmatprep.mubr.f32.mxu0 0.0
      %203 = vmatmul.mubr.f32.gmra.mxu0 %v136
      %v204 = vpop.f32.mrf.mxu0
      %v205 = vadd.f32 %v130, %v204
      %v206 = vpop.f32.mrf.mxu0
      %207 = vdwg.mxu0
      %v208 = vmax.f32 %v205, 0.0
      %v209 = vld [vmem:[#allocation8] sm:$0xff]
      %v210 = vld [vmem:[#allocation8 + $0x8] sm:$0xff]
      %v211 = vld [vmem:[#allocation8 + $0x10] sm:$0xff]
      %v212 = vld [vmem:[#allocation8 + $0x18] sm:$0xff]
      %v213 = vld [vmem:[#allocation8 + $0x20] sm:$0xff]
      %v214 = vld [vmem:[#allocation8 + $0x28] sm:$0xff]
      %v215 = vld [vmem:[#allocation8 + $0x30] sm:$0xff]
      %v216 = vld [vmem:[#allocation8 + $0x38] sm:$0xff]
      %v217 = vld [vmem:[#allocation8 + $0x40] sm:$0xff]
      %v218 = vld [vmem:[#allocation8 + $0x48] sm:$0xff]
      %v219 = vld [vmem:[#allocation8 + $0x50] sm:$0xff]
      %v220 = vld [vmem:[#allocation8 + $0x58] sm:$0xff]
      %v221 = vld [vmem:[#allocation8 + $0x60] sm:$0xff]
      %v222 = vld [vmem:[#allocation8 + $0x68] sm:$0xff]
      %v223 = vld [vmem:[#allocation8 + $0x70] sm:$0xff]
      %v224 = vld [vmem:[#allocation8 + $0x78] sm:$0xff]
      %v225 = vld [vmem:[%s4] sm:$0x1]
      %v227 = vlaneseq
      %v228 = vshrl.u32 %v227, 7
      %v229 = vsub.s32 0, %v228
      %v230 = vrot.slane %v225, %v229
      %232 = vmatprep.subr.mxu0 0.0
      %233 = vmatpush1.msra.mxu0 %v224
      %234 = vmatprep.subr.mxu0 0.0
      %235 = vmatpush1.msra.mxu0 %v223
      %236 = vmatprep.subr.mxu0 0.0
      %237 = vmatpush1.msra.mxu0 %v222
      %238 = vmatprep.subr.mxu0 0.0
      %239 = vmatpush1.msra.mxu0 %v221
      %240 = vmatprep.subr.mxu0 0.0
      %241 = vmatpush1.msra.mxu0 %v220
      %242 = vmatprep.subr.mxu0 0.0
      %243 = vmatpush1.msra.mxu0 %v219
      %244 = vmatprep.subr.mxu0 0.0
      %245 = vmatpush1.msra.mxu0 %v218
      %246 = vmatprep.subr.mxu0 0.0
      %247 = vmatpush1.msra.mxu0 %v217
      %248 = vmatprep.subr.mxu0 0.0
      %249 = vmatpush1.msra.mxu0 %v216
      %250 = vmatprep.subr.mxu0 0.0
      %251 = vmatpush1.msra.mxu0 %v215
      %252 = vmatprep.subr.mxu0 0.0
      %253 = vmatpush1.msra.mxu0 %v214
      %254 = vmatprep.subr.mxu0 0.0
      %255 = vmatpush1.msra.mxu0 %v213
      %256 = vmatprep.subr.mxu0 0.0
      %257 = vmatpush1.msra.mxu0 %v212
      %258 = vmatprep.subr.mxu0 0.0
      %259 = vmatpush1.msra.mxu0 %v211
      %260 = vmatprep.subr.mxu0 0.0
      %261 = vmatpush1.msra.mxu0 %v210
      %262 = vmatprep.subr.mxu0 0.0
      %263 = vmatpush1.msra.mxu0 %v209
      %264 = vmatprep.subr.mxu0 0.0
      %265 = vmatpush2.msra.mxu0 0.0
      %266 = vmatprep.subr.mxu0 0.0
      %267 = vmatpush2.msra.mxu0 0.0
      %268 = vmatprep.subr.mxu0 0.0
      %269 = vmatpush2.msra.mxu0 0.0
      %270 = vmatprep.subr.mxu0 0.0
      %271 = vmatpush2.msra.mxu0 0.0
      %272 = vmatprep.subr.mxu0 0.0
      %273 = vmatpush2.msra.mxu0 0.0
      %274 = vmatprep.subr.mxu0 0.0
      %275 = vmatpush2.msra.mxu0 0.0
      %276 = vmatprep.subr.mxu0 0.0
      %277 = vmatpush2.msra.mxu0 0.0
      %278 = vmatprep.subr.mxu0 0.0
      %279 = vmatpush2.msra.mxu0 0.0
      %280 = vmatprep.subr.mxu0 0.0
      %281 = vmatpush2.msra.mxu0 0.0
      %282 = vmatprep.subr.mxu0 0.0
      %283 = vmatpush2.msra.mxu0 0.0
      %284 = vmatprep.subr.mxu0 0.0
      %285 = vmatpush2.msra.mxu0 0.0
      %286 = vmatprep.subr.mxu0 0.0
      %287 = vmatpush2.msra.mxu0 0.0
      %288 = vmatprep.subr.mxu0 0.0
      %289 = vmatpush2.msra.mxu0 0.0
      %290 = vmatprep.subr.mxu0 0.0
      %291 = vmatpush2.msra.mxu0 0.0
      %292 = vmatprep.subr.mxu0 0.0
      %293 = vmatpush2.msra.mxu0 0.0
      %294 = vmatprep.subr.mxu0 0.0
      %295 = vmatpush2.msra.mxu0 0.0
      %296 = vmatprep.mubr.f32.mxu0 0.0
      %297 = vmatmul.mubr.f32.gmra.mxu0 %v208
      %v298 = vpop.f32.mrf.mxu0
      %v299 = vadd.f32 %v230, %v298
      %v300 = vpop.f32.mrf.mxu0
      %301 = vdwg.mxu0
      %v302 = vmax.f32 %v299, 0.0
      %v303 = vld [vmem:[#allocation9] sm:$0xff]
      %v304 = vld [vmem:[#allocation9 + $0x8] sm:$0xff]
      %v305 = vld [vmem:[#allocation9 + $0x10] sm:$0xff]
      %v306 = vld [vmem:[#allocation9 + $0x18] sm:$0xff]
      %v307 = vld [vmem:[#allocation9 + $0x20] sm:$0xff]
      %v308 = vld [vmem:[#allocation9 + $0x28] sm:$0xff]
      %v309 = vld [vmem:[#allocation9 + $0x30] sm:$0xff]
      %v310 = vld [vmem:[#allocation9 + $0x38] sm:$0xff]
      %v311 = vld [vmem:[#allocation9 + $0x40] sm:$0xff]
      %v312 = vld [vmem:[#allocation9 + $0x48] sm:$0xff]
      %v313 = vld [vmem:[#allocation9 + $0x50] sm:$0xff]
      %v314 = vld [vmem:[#allocation9 + $0x58] sm:$0xff]
      %v315 = vld [vmem:[#allocation9 + $0x60] sm:$0xff]
      %v316 = vld [vmem:[#allocation9 + $0x68] sm:$0xff]
      %v317 = vld [vmem:[#allocation9 + $0x70] sm:$0xff]
      %v318 = vld [vmem:[#allocation9 + $0x78] sm:$0xff]
      %v319 = vld [vmem:[%s6] sm:$0x1]
      %v321 = vlaneseq
      %v322 = vshrl.u32 %v321, 7
      %v323 = vsub.s32 0, %v322
      %v324 = vrot.slane %v319, %v323
      %326 = vmatprep.subr.mxu0 0.0
      %327 = vmatpush1.msra.mxu0 %v318
      %328 = vmatprep.subr.mxu0 0.0
      %329 = vmatpush1.msra.mxu0 %v317
      %330 = vmatprep.subr.mxu0 0.0
      %331 = vmatpush1.msra.mxu0 %v316
      %332 = vmatprep.subr.mxu0 0.0
      %333 = vmatpush1.msra.mxu0 %v315
      %334 = vmatprep.subr.mxu0 0.0
      %335 = vmatpush1.msra.mxu0 %v314
      %336 = vmatprep.subr.mxu0 0.0
      %337 = vmatpush1.msra.mxu0 %v313
      %338 = vmatprep.subr.mxu0 0.0
      %339 = vmatpush1.msra.mxu0 %v312
      %340 = vmatprep.subr.mxu0 0.0
      %341 = vmatpush1.msra.mxu0 %v311
      %342 = vmatprep.subr.mxu0 0.0
      %343 = vmatpush1.msra.mxu0 %v310
      %344 = vmatprep.subr.mxu0 0.0
      %345 = vmatpush1.msra.mxu0 %v309
      %346 = vmatprep.subr.mxu0 0.0
      %347 = vmatpush1.msra.mxu0 %v308
      %348 = vmatprep.subr.mxu0 0.0
      %349 = vmatpush1.msra.mxu0 %v307
      %350 = vmatprep.subr.mxu0 0.0
      %351 = vmatpush1.msra.mxu0 %v306
      %352 = vmatprep.subr.mxu0 0.0
      %353 = vmatpush1.msra.mxu0 %v305
      %354 = vmatprep.subr.mxu0 0.0
      %355 = vmatpush1.msra.mxu0 %v304
      %356 = vmatprep.subr.mxu0 0.0
      %357 = vmatpush1.msra.mxu0 %v303
      %358 = vmatprep.subr.mxu0 0.0
      %359 = vmatpush2.msra.mxu0 0.0
      %360 = vmatprep.subr.mxu0 0.0
      %361 = vmatpush2.msra.mxu0 0.0
      %362 = vmatprep.subr.mxu0 0.0
      %363 = vmatpush2.msra.mxu0 0.0
      %364 = vmatprep.subr.mxu0 0.0
      %365 = vmatpush2.msra.mxu0 0.0
      %366 = vmatprep.subr.mxu0 0.0
      %367 = vmatpush2.msra.mxu0 0.0
      %368 = vmatprep.subr.mxu0 0.0
      %369 = vmatpush2.msra.mxu0 0.0
      %370 = vmatprep.subr.mxu0 0.0
      %371 = vmatpush2.msra.mxu0 0.0
      %372 = vmatprep.subr.mxu0 0.0
      %373 = vmatpush2.msra.mxu0 0.0
      %374 = vmatprep.subr.mxu0 0.0
      %375 = vmatpush2.msra.mxu0 0.0
      %376 = vmatprep.subr.mxu0 0.0
      %377 = vmatpush2.msra.mxu0 0.0
      %378 = vmatprep.subr.mxu0 0.0
      %379 = vmatpush2.msra.mxu0 0.0
      %380 = vmatprep.subr.mxu0 0.0
      %381 = vmatpush2.msra.mxu0 0.0
      %382 = vmatprep.subr.mxu0 0.0
      %383 = vmatpush2.msra.mxu0 0.0
      %384 = vmatprep.subr.mxu0 0.0
      %385 = vmatpush2.msra.mxu0 0.0
      %386 = vmatprep.subr.mxu0 0.0
      %387 = vmatpush2.msra.mxu0 0.0
      %388 = vmatprep.subr.mxu0 0.0
      %389 = vmatpush2.msra.mxu0 0.0
      %390 = vmatprep.mubr.f32.mxu0 0.0
      %391 = vmatmul.mubr.f32.gmra.mxu0 %v302
      %v392 = vpop.f32.mrf.mxu0
      %v393 = vadd.f32 %v324, %v392
      %v394 = vpop.f32.mrf.mxu0
      %395 = vdwg.mxu0
      %v396 = vxor.u32 %v393, 2147483648
      %v397 = vmul.f32 %v396, 1.442695
      %v398 = vpow.pop %v397
      %v399 = vadd.f32 %v398, 1.0
      %v400 = vrcp.pop %v399
      %v401 = vmul.f32 1.0, %v400
      %402 = vst [vmem:[#allocation11] sm:$0x3] %v401
    $region53: #{tpu_custom_call.1} parent=1 // pred_fallthru
      _
    // Predicated region
    $region54: #{tpu_custom_call.1} parent=1 // pred_check
      _
    $region55: #{tpu_custom_call.1} parent=1 // pred_check_branch
      %404 = sbr.rel (0) target = $region57
    $region56: #{tpu_custom_call.1} parent=1 // pred_region
      %s406 = ssub.s32 32, 32
      %407 = vsyncadd [#allocation5], %s406
      %s409 = sshll.u32 [#allocation11], 4
      %s410 = int_to_ptr.vmem [resolvable:$true] %s409
      %412 = dma.vmem_to_hbm [thread:$0]  %s410, 32, %s7, [#allocation5]
    $region57: #{tpu_custom_call.1} parent=1 // pred_fallthru
      _
    // Predicated region
    $region58: #{tpu_custom_call.1} parent=1 // pred_check
      _
    $region59: #{tpu_custom_call.1} parent=1 // pred_check_branch
      %414 = sbr.rel (0) target = $region61
    $region60: #{tpu_custom_call.1} parent=1 // pred_region
      %415 = dma.done [#allocation5], 32
    $region61: #{tpu_custom_call.1} parent=1 // pred_fallthru
      _
    %416 = vsyncpa [#allocation4], 1
    %417 = vsyncpa [#allocation7], 1
    %418 = vsyncpa [#allocation10], 1
    %419 = vsyncpa [#allocation5], 1

</llo_original>
